<compile_context>
chip_gen: v7x
topology: tpu7x:2x2x1
jax: 0.10.0
libtpu: 0.0.40
codegen_flags: <defaults>
</compile_context>

<pallas_src>
import functools

import jax
import jax.numpy as jnp
from jax.experimental import pallas as pl
from jax.experimental.pallas import tpu as pltpu


# ---------------------------------------------------------------------------
# Pallas kernel: one batch element per grid step
# ---------------------------------------------------------------------------
def upskip_kernel(x_ref, rd_ref, rc_ref, w_ref, b_ref, o_ref, *, width):
    x = x_ref[...]                       # (Cin,  H*W)  bf16
    w = w_ref[...]                       # (Cout, Cin)  bf16

    # 1x1 conv at LOW resolution (commutes with the bilinear upsample).
    y = jnp.dot(w, x, preferred_element_type=jnp.float32)   # (Cout, H*W) f32
    y = y + b_ref[...]                   # bias (Cout, 1) broadcasts over lanes

    cout, hw = y.shape

    # --- separable 2x bilinear upsample (align_corners=False), phase form ---
    # Flattened spatial index s = j*width + k.  Row neighbours are s -/+ width;
    # the leading/trailing width-wide blocks implement the edge clamp for free.
    y_hprev = jnp.concatenate([y[:, :width], y[:, :-width]], axis=1)  # row j-1
    y_hnext = jnp.concatenate([y[:, width:], y[:, -width:]], axis=1)  # row j+1
    top = 0.75 * y + 0.25 * y_hprev      # output row 2j
    bot = 0.75 * y + 0.25 * y_hnext      # output row 2j+1

    # Column neighbours are s -/+ 1, clamped at every image-row boundary.
    col = jax.lax.broadcasted_iota(jnp.int32, (cout, hw), 1) % width
    first_col = col == 0
    last_col = col == (width - 1)

    def wprev(t):
        s = jnp.concatenate([t[:, :1], t[:, :-1]], axis=1)
        return jnp.where(first_col, t, s)

    def wnext(t):
        s = jnp.concatenate([t[:, 1:], t[:, -1:]], axis=1)
        return jnp.where(last_col, t, s)

    ee = 0.75 * top + 0.25 * wprev(top)  # output pixel (2j,   2k)
    eo = 0.75 * top + 0.25 * wnext(top)  # output pixel (2j,   2k+1)
    oe = 0.75 * bot + 0.25 * wprev(bot)  # output pixel (2j+1, 2k)
    oo = 0.75 * bot + 0.25 * wnext(bot)  # output pixel (2j+1, 2k+1)

    # Fused residual adds (feat_diff + feat_con), already in phase layout.
    o_ref[0] = ee + rd_ref[0] + rc_ref[0]
    o_ref[1] = eo + rd_ref[1] + rc_ref[1]
    o_ref[2] = oe + rd_ref[2] + rc_ref[2]
    o_ref[3] = oo + rd_ref[3] + rc_ref[3]


# ---------------------------------------------------------------------------
# Wrapper: layout glue (NCHW <-> channel-first phase layout) + pallas_call
# ---------------------------------------------------------------------------
@jax.jit
def upskip(feat, feat_diff, feat_con, weight, bias):
    B, Cin, H, W = feat.shape
    Cout = weight.shape[0]
    HW = H * W

    # NCHW -> channel-first, space-flattened; matmul operands in bf16.
    x = feat.reshape(B, Cin, HW).astype(jnp.bfloat16)
    w = weight.reshape(Cout, Cin).astype(jnp.bfloat16)
    b = bias.reshape(Cout, 1).astype(jnp.float32)

    def to_phase(r):
        # (B, Cout, 2H, 2W) -> (B, 4, Cout, H*W); phase p = 2*a + b holds
        # output pixels (2j+a, 2k+b) at flat spatial index j*W + k.
        r = r.reshape(B, Cout, H, 2, W, 2)
        r = r.transpose(0, 3, 5, 1, 2, 4)          # (B, 2, 2, Cout, H, W)
        return r.reshape(B, 4, Cout, HW)

    rd = to_phase(feat_diff.astype(jnp.float32))
    rc = to_phase(feat_con.astype(jnp.float32))

    kernel = functools.partial(upskip_kernel, width=W)

    # TODO(synk): for production-sized feature maps, add a second grid axis
    # tiling H*W (with a W-element halo for the row interpolation) so a single
    # step's working set stays within v7x's 64 MiB VMEM.
    out_phase = pl.pallas_call(
        kernel,
        out_shape=jax.ShapeDtypeStruct((B, 4, Cout, HW), jnp.float32),
        grid=(B,),
        in_specs=[
            pl.BlockSpec((None, Cin, HW), lambda i: (i, 0, 0)),
            pl.BlockSpec((None, 4, Cout, HW), lambda i: (i, 0, 0, 0)),
            pl.BlockSpec((None, 4, Cout, HW), lambda i: (i, 0, 0, 0)),
            pl.BlockSpec((Cout, Cin), lambda i: (0, 0)),
            pl.BlockSpec((Cout, 1), lambda i: (0, 0)),
        ],
        out_specs=pl.BlockSpec((None, 4, Cout, HW), lambda i: (i, 0, 0, 0)),
        compiler_params=pltpu.CompilerParams(
            dimension_semantics=("parallel",),
        ),
    )(x, rd, rc, w, b)

    # (B, 4, Cout, H*W) phases -> interleaved NCHW (B, Cout, 2H, 2W).
    out = out_phase.reshape(B, 2, 2, Cout, H, W)
    out = out.transpose(0, 3, 4, 1, 5, 2)          # (B, Cout, H, 2, W, 2)
    return out.reshape(B, Cout, 2 * H, 2 * W)


# ---------------------------------------------------------------------------
# Pure-JAX reference (mirrors the PyTorch forward: upsample -> conv -> adds)
# ---------------------------------------------------------------------------
def _up2x_ref(x, axis):
    # 2x linear upsample along `axis`, align_corners=False, edge-clamped.
    x = jnp.moveaxis(x, axis, -1)
    prev = jnp.concatenate([x[..., :1], x[..., :-1]], axis=-1)
    nxt = jnp.concatenate([x[..., 1:], x[..., -1:]], axis=-1)
    even = 0.75 * x + 0.25 * prev
    odd = 0.75 * x + 0.25 * nxt
    out = jnp.stack([even, odd], axis=-1)
    out = out.reshape(x.shape[:-1] + (2 * x.shape[-1],))
    return jnp.moveaxis(out, -1, axis)


def upskip_ref(feat, feat_diff, feat_con, weight, bias):
    Cout = weight.shape[0]
    up = _up2x_ref(_up2x_ref(feat, 2), 3)                    # bilinear x2 (NCHW)
    y = jnp.einsum("oc,bchw->bohw", weight, up) + bias.reshape(1, Cout, 1, 1)
    return y + feat_diff + feat_con


# ---------------------------------------------------------------------------
if __name__ == "__main__":
    B, Cin, Cout, H, W = 2, 8, 4, 16, 16

    key = jax.random.PRNGKey(0)
    k1, k2, k3, k4, k5 = jax.random.split(key, 5)
    feat = jax.random.normal(k1, (B, Cin, H, W), jnp.float32)
    feat_diff = jax.random.normal(k2, (B, Cout, 2 * H, 2 * W), jnp.float32)
    feat_con = jax.random.normal(k3, (B, Cout, 2 * H, 2 * W), jnp.float32)
    weight = jax.random.normal(k4, (Cout, Cin), jnp.float32) * 0.1   # Conv2d 1x1 weight
    bias = jax.random.normal(k5, (Cout,), jnp.float32) * 0.1         # Conv2d bias

    out = upskip(feat, feat_diff, feat_con, weight, bias)
    out = jax.block_until_ready(out)

    ref = upskip_ref(feat, feat_diff, feat_con, weight, bias)
    ref = jax.block_until_ready(ref)

    assert out.shape == (B, Cout, 2 * H, 2 * W)
    max_err = float(jnp.max(jnp.abs(out - ref)))
    assert jnp.allclose(out, ref, atol=1e-2, rtol=1e-2), max_err
    print("KERNEL_OK")
</pallas_src>

<mosaic_0001>
module attributes {stable_mosaic.version = 11 : i64} {
  func.func @upskip_kernel(%arg0: i32, %arg1: memref<1x8x256xbf16, #tpu.memory_space<vmem>>, %arg2: memref<1x4x4x256xf32, #tpu.memory_space<vmem>>, %arg3: memref<1x4x4x256xf32, #tpu.memory_space<vmem>>, %arg4: memref<4x8xbf16, #tpu.memory_space<vmem>>, %arg5: memref<4x1xf32, #tpu.memory_space<vmem>>, %arg6: memref<1x4x4x256xf32, #tpu.memory_space<vmem>>) attributes {dimension_semantics = [#tpu.dimension_semantics<parallel>], iteration_bounds = array<i64: 2>, scalar_prefetch = 0 : i64, scratch_operands = 0 : i64, tpu.core_type = #tpu.core_type<tc>, window_params = [{transform_indices = @transform_0, window_bounds = array<i64: 1, 8, 256>}, {transform_indices = @transform_1, window_bounds = array<i64: 1, 4, 4, 256>}, {transform_indices = @transform_2, window_bounds = array<i64: 1, 4, 4, 256>}, {pipeline_mode = #tpu.pipeline_mode<synchronous>, transform_indices = @transform_3, window_bounds = array<i64: 4, 8>}, {pipeline_mode = #tpu.pipeline_mode<synchronous>, transform_indices = @transform_4, window_bounds = array<i64: 4, 1>}, {transform_indices = @transform_5, window_bounds = array<i64: 1, 4, 4, 256>}]} {
    %c0 = arith.constant 0 : index
    %c0_0 = arith.constant 0 : index
    %c0_1 = arith.constant 0 : index
    %0 = vector.load %arg1[%c0, %c0_0, %c0_1] : memref<1x8x256xbf16, #tpu.memory_space<vmem>>, vector<1x8x256xbf16>
    %1 = vector.shape_cast %0 : vector<1x8x256xbf16> to vector<8x256xbf16>
    %c0_2 = arith.constant 0 : index
    %c0_3 = arith.constant 0 : index
    %2 = vector.load %arg4[%c0_2, %c0_3] : memref<4x8xbf16, #tpu.memory_space<vmem>>, vector<4x8xbf16>
    %cst = arith.constant dense<0.000000e+00> : vector<4x256xf32>
    %3 = tpu.matmul %2, %1, %cst {dimension_numbers = #tpu.dot_dimension_numbers<[1], [0], [0], [1], [0, 0, 1, 1], [], []>} : vector<4x8xbf16>, vector<8x256xbf16>, vector<4x256xf32> -> vector<4x256xf32>
    %c0_4 = arith.constant 0 : index
    %c0_5 = arith.constant 0 : index
    %4 = vector.load %arg5[%c0_4, %c0_5] : memref<4x1xf32, #tpu.memory_space<vmem>>, vector<4x1xf32>
    %5 = vector.broadcast %4 : vector<4x1xf32> to vector<4x256xf32>
    %6 = arith.addf %3, %5 : vector<4x256xf32>
    %7 = vector.extract_strided_slice %6 {offsets = [0, 0], sizes = [4, 16], strides = [1, 1]} : vector<4x256xf32> to vector<4x16xf32>
    %8 = vector.extract_strided_slice %6 {offsets = [0, 0], sizes = [4, 240], strides = [1, 1]} : vector<4x256xf32> to vector<4x240xf32>
    %9 = tpu.concatenate %7, %8 in 1 : vector<4x16xf32>, vector<4x240xf32> -> vector<4x256xf32>
    %10 = vector.extract_strided_slice %6 {offsets = [0, 16], sizes = [4, 240], strides = [1, 1]} : vector<4x256xf32> to vector<4x240xf32>
    %11 = vector.extract_strided_slice %6 {offsets = [0, 240], sizes = [4, 16], strides = [1, 1]} : vector<4x256xf32> to vector<4x16xf32>
    %12 = tpu.concatenate %10, %11 in 1 : vector<4x240xf32>, vector<4x16xf32> -> vector<4x256xf32>
    %cst_6 = arith.constant 7.500000e-01 : f32
    %13 = vector.broadcast %cst_6 : f32 to vector<4x256xf32>
    %14 = arith.mulf %13, %6 : vector<4x256xf32>
    %cst_7 = arith.constant 2.500000e-01 : f32
    %15 = vector.broadcast %cst_7 : f32 to vector<4x256xf32>
    %16 = arith.mulf %15, %9 : vector<4x256xf32>
    %17 = arith.addf %14, %16 : vector<4x256xf32>
    %cst_8 = arith.constant 7.500000e-01 : f32
    %18 = vector.broadcast %cst_8 : f32 to vector<4x256xf32>
    %19 = arith.mulf %18, %6 : vector<4x256xf32>
    %cst_9 = arith.constant 2.500000e-01 : f32
    %20 = vector.broadcast %cst_9 : f32 to vector<4x256xf32>
    %21 = arith.mulf %20, %12 : vector<4x256xf32>
    %22 = arith.addf %19, %21 : vector<4x256xf32>
    %23 = tpu.iota {dimensions = array<i32: 1>} : vector<4x256xi32>
    %c16_i32 = arith.constant 16 : i32
    %c0_i32 = arith.constant 0 : i32
    %24 = arith.cmpi eq, %c16_i32, %c0_i32 : i32
    %c1_i32 = arith.constant 1 : i32
    %25 = arith.select %24, %c1_i32, %c16_i32 : i32
    %26 = vector.broadcast %25 : i32 to vector<4x256xi32>
    %27 = arith.remsi %23, %26 : vector<4x256xi32>
    %c0_i32_10 = arith.constant 0 : i32
    %28 = vector.broadcast %c0_i32_10 : i32 to vector<4x256xi32>
    %29 = arith.cmpi ne, %27, %28 : vector<4x256xi32>
    %c0_i32_11 = arith.constant 0 : i32
    %30 = vector.broadcast %c0_i32_11 : i32 to vector<4x256xi32>
    %31 = arith.cmpi slt, %27, %30 : vector<4x256xi32>
    %c0_i32_12 = arith.constant 0 : i32
    %32 = arith.cmpi slt, %25, %c0_i32_12 : i32
    %33 = vector.broadcast %32 : i1 to vector<4x256xi1>
    %34 = vector.broadcast %33 : vector<4x256xi1> to vector<4x256xi1>
    %35 = arith.xori %31, %34 : vector<4x256xi1>
    %36 = arith.andi %35, %29 : vector<4x256xi1>
    %37 = vector.broadcast %25 : i32 to vector<4x256xi32>
    %38 = arith.addi %27, %37 : vector<4x256xi32>
    %39 = arith.select %36, %38, %27 : vector<4x256xi1>, vector<4x256xi32>
    %c0_i32_13 = arith.constant 0 : i32
    %40 = vector.broadcast %c0_i32_13 : i32 to vector<4x256xi32>
    %41 = arith.cmpi eq, %39, %40 : vector<4x256xi32>
    %c15_i32 = arith.constant 15 : i32
    %42 = vector.broadcast %c15_i32 : i32 to vector<4x256xi32>
    %43 = arith.cmpi eq, %39, %42 : vector<4x256xi32>
    %cst_14 = arith.constant 7.500000e-01 : f32
    %44 = vector.broadcast %cst_14 : f32 to vector<4x256xf32>
    %45 = arith.mulf %44, %17 : vector<4x256xf32>
    %46 = vector.extract_strided_slice %17 {offsets = [0, 0], sizes = [4, 1], strides = [1, 1]} : vector<4x256xf32> to vector<4x1xf32>
    %47 = vector.extract_strided_slice %17 {offsets = [0, 0], sizes = [4, 255], strides = [1, 1]} : vector<4x256xf32> to vector<4x255xf32>
    %48 = tpu.concatenate %46, %47 in 1 : vector<4x1xf32>, vector<4x255xf32> -> vector<4x256xf32>
    %49 = arith.select %41, %17, %48 : vector<4x256xi1>, vector<4x256xf32>
    %cst_15 = arith.constant 2.500000e-01 : f32
    %50 = vector.broadcast %cst_15 : f32 to vector<4x256xf32>
    %51 = arith.mulf %50, %49 : vector<4x256xf32>
    %52 = arith.addf %45, %51 : vector<4x256xf32>
    %cst_16 = arith.constant 7.500000e-01 : f32
    %53 = vector.broadcast %cst_16 : f32 to vector<4x256xf32>
    %54 = arith.mulf %53, %17 : vector<4x256xf32>
    %55 = vector.extract_strided_slice %17 {offsets = [0, 1], sizes = [4, 255], strides = [1, 1]} : vector<4x256xf32> to vector<4x255xf32>
    %56 = vector.extract_strided_slice %17 {offsets = [0, 255], sizes = [4, 1], strides = [1, 1]} : vector<4x256xf32> to vector<4x1xf32>
    %57 = tpu.concatenate %55, %56 in 1 : vector<4x255xf32>, vector<4x1xf32> -> vector<4x256xf32>
    %58 = arith.select %43, %17, %57 : vector<4x256xi1>, vector<4x256xf32>
    %cst_17 = arith.constant 2.500000e-01 : f32
    %59 = vector.broadcast %cst_17 : f32 to vector<4x256xf32>
    %60 = arith.mulf %59, %58 : vector<4x256xf32>
    %61 = arith.addf %54, %60 : vector<4x256xf32>
    %cst_18 = arith.constant 7.500000e-01 : f32
    %62 = vector.broadcast %cst_18 : f32 to vector<4x256xf32>
    %63 = arith.mulf %62, %22 : vector<4x256xf32>
    %64 = vector.extract_strided_slice %22 {offsets = [0, 0], sizes = [4, 1], strides = [1, 1]} : vector<4x256xf32> to vector<4x1xf32>
    %65 = vector.extract_strided_slice %22 {offsets = [0, 0], sizes = [4, 255], strides = [1, 1]} : vector<4x256xf32> to vector<4x255xf32>
    %66 = tpu.concatenate %64, %65 in 1 : vector<4x1xf32>, vector<4x255xf32> -> vector<4x256xf32>
    %67 = arith.select %41, %22, %66 : vector<4x256xi1>, vector<4x256xf32>
    %cst_19 = arith.constant 2.500000e-01 : f32
    %68 = vector.broadcast %cst_19 : f32 to vector<4x256xf32>
    %69 = arith.mulf %68, %67 : vector<4x256xf32>
    %70 = arith.addf %63, %69 : vector<4x256xf32>
    %cst_20 = arith.constant 7.500000e-01 : f32
    %71 = vector.broadcast %cst_20 : f32 to vector<4x256xf32>
    %72 = arith.mulf %71, %22 : vector<4x256xf32>
    %73 = vector.extract_strided_slice %22 {offsets = [0, 1], sizes = [4, 255], strides = [1, 1]} : vector<4x256xf32> to vector<4x255xf32>
    %74 = vector.extract_strided_slice %22 {offsets = [0, 255], sizes = [4, 1], strides = [1, 1]} : vector<4x256xf32> to vector<4x1xf32>
    %75 = tpu.concatenate %73, %74 in 1 : vector<4x255xf32>, vector<4x1xf32> -> vector<4x256xf32>
    %76 = arith.select %43, %22, %75 : vector<4x256xi1>, vector<4x256xf32>
    %cst_21 = arith.constant 2.500000e-01 : f32
    %77 = vector.broadcast %cst_21 : f32 to vector<4x256xf32>
    %78 = arith.mulf %77, %76 : vector<4x256xf32>
    %79 = arith.addf %72, %78 : vector<4x256xf32>
    %c0_22 = arith.constant 0 : index
    %c0_23 = arith.constant 0 : index
    %c0_24 = arith.constant 0 : index
    %c0_25 = arith.constant 0 : index
    %80 = vector.load %arg2[%c0_22, %c0_23, %c0_24, %c0_25] : memref<1x4x4x256xf32, #tpu.memory_space<vmem>>, vector<1x1x4x256xf32>
    %81 = vector.shape_cast %80 : vector<1x1x4x256xf32> to vector<4x256xf32>
    %82 = arith.addf %52, %81 : vector<4x256xf32>
    %c0_26 = arith.constant 0 : index
    %c0_27 = arith.constant 0 : index
    %c0_28 = arith.constant 0 : index
    %c0_29 = arith.constant 0 : index
    %83 = vector.load %arg3[%c0_26, %c0_27, %c0_28, %c0_29] : memref<1x4x4x256xf32, #tpu.memory_space<vmem>>, vector<1x1x4x256xf32>
    %84 = vector.shape_cast %83 : vector<1x1x4x256xf32> to vector<4x256xf32>
    %85 = arith.addf %82, %84 : vector<4x256xf32>
    %c0_30 = arith.constant 0 : index
    %c0_31 = arith.constant 0 : index
    %c0_32 = arith.constant 0 : index
    %c0_33 = arith.constant 0 : index
    %86 = vector.load %arg6[%c0_30, %c0_31, %c0_32, %c0_33] : memref<1x4x4x256xf32, #tpu.memory_space<vmem>>, vector<1x1x4x256xf32>
    %87 = vector.shape_cast %86 : vector<1x1x4x256xf32> to vector<4x256xf32>
    %88 = vector.shape_cast %85 : vector<4x256xf32> to vector<1x1x4x256xf32>
    tpu.vector_store %arg6[%c0_30, %c0_31, %c0_32, %c0_33], %88 {strides = array<i32>} : memref<1x4x4x256xf32, #tpu.memory_space<vmem>>, vector<1x1x4x256xf32>,
    %c0_34 = arith.constant 0 : index
    %c1 = arith.constant 1 : index
    %c0_35 = arith.constant 0 : index
    %c0_36 = arith.constant 0 : index
    %89 = vector.load %arg2[%c0_34, %c1, %c0_35, %c0_36] : memref<1x4x4x256xf32, #tpu.memory_space<vmem>>, vector<1x1x4x256xf32>
    %90 = vector.shape_cast %89 : vector<1x1x4x256xf32> to vector<4x256xf32>
    %91 = arith.addf %61, %90 : vector<4x256xf32>
    %c0_37 = arith.constant 0 : index
    %c1_38 = arith.constant 1 : index
    %c0_39 = arith.constant 0 : index
    %c0_40 = arith.constant 0 : index
    %92 = vector.load %arg3[%c0_37, %c1_38, %c0_39, %c0_40] : memref<1x4x4x256xf32, #tpu.memory_space<vmem>>, vector<1x1x4x256xf32>
    %93 = vector.shape_cast %92 : vector<1x1x4x256xf32> to vector<4x256xf32>
    %94 = arith.addf %91, %93 : vector<4x256xf32>
    %c0_41 = arith.constant 0 : index
    %c1_42 = arith.constant 1 : index
    %c0_43 = arith.constant 0 : index
    %c0_44 = arith.constant 0 : index
    %95 = vector.load %arg6[%c0_41, %c1_42, %c0_43, %c0_44] : memref<1x4x4x256xf32, #tpu.memory_space<vmem>>, vector<1x1x4x256xf32>
    %96 = vector.shape_cast %95 : vector<1x1x4x256xf32> to vector<4x256xf32>
    %97 = vector.shape_cast %94 : vector<4x256xf32> to vector<1x1x4x256xf32>
    tpu.vector_store %arg6[%c0_41, %c1_42, %c0_43, %c0_44], %97 {strides = array<i32>} : memref<1x4x4x256xf32, #tpu.memory_space<vmem>>, vector<1x1x4x256xf32>,
    %c0_45 = arith.constant 0 : index
    %c2 = arith.constant 2 : index
    %c0_46 = arith.constant 0 : index
    %c0_47 = arith.constant 0 : index
    %98 = vector.load %arg2[%c0_45, %c2, %c0_46, %c0_47] : memref<1x4x4x256xf32, #tpu.memory_space<vmem>>, vector<1x1x4x256xf32>
    %99 = vector.shape_cast %98 : vector<1x1x4x256xf32> to vector<4x256xf32>
    %100 = arith.addf %70, %99 : vector<4x256xf32>
    %c0_48 = arith.constant 0 : index
    %c2_49 = arith.constant 2 : index
    %c0_50 = arith.constant 0 : index
    %c0_51 = arith.constant 0 : index
    %101 = vector.load %arg3[%c0_48, %c2_49, %c0_50, %c0_51] : memref<1x4x4x256xf32, #tpu.memory_space<vmem>>, vector<1x1x4x256xf32>
    %102 = vector.shape_cast %101 : vector<1x1x4x256xf32> to vector<4x256xf32>
    %103 = arith.addf %100, %102 : vector<4x256xf32>
    %c0_52 = arith.constant 0 : index
    %c2_53 = arith.constant 2 : index
    %c0_54 = arith.constant 0 : index
    %c0_55 = arith.constant 0 : index
    %104 = vector.load %arg6[%c0_52, %c2_53, %c0_54, %c0_55] : memref<1x4x4x256xf32, #tpu.memory_space<vmem>>, vector<1x1x4x256xf32>
    %105 = vector.shape_cast %104 : vector<1x1x4x256xf32> to vector<4x256xf32>
    %106 = vector.shape_cast %103 : vector<4x256xf32> to vector<1x1x4x256xf32>
    tpu.vector_store %arg6[%c0_52, %c2_53, %c0_54, %c0_55], %106 {strides = array<i32>} : memref<1x4x4x256xf32, #tpu.memory_space<vmem>>, vector<1x1x4x256xf32>,
    %c0_56 = arith.constant 0 : index
    %c3 = arith.constant 3 : index
    %c0_57 = arith.constant 0 : index
    %c0_58 = arith.constant 0 : index
    %107 = vector.load %arg2[%c0_56, %c3, %c0_57, %c0_58] : memref<1x4x4x256xf32, #tpu.memory_space<vmem>>, vector<1x1x4x256xf32>
    %108 = vector.shape_cast %107 : vector<1x1x4x256xf32> to vector<4x256xf32>
    %109 = arith.addf %79, %108 : vector<4x256xf32>
    %c0_59 = arith.constant 0 : index
    %c3_60 = arith.constant 3 : index
    %c0_61 = arith.constant 0 : index
    %c0_62 = arith.constant 0 : index
    %110 = vector.load %arg3[%c0_59, %c3_60, %c0_61, %c0_62] : memref<1x4x4x256xf32, #tpu.memory_space<vmem>>, vector<1x1x4x256xf32>
    %111 = vector.shape_cast %110 : vector<1x1x4x256xf32> to vector<4x256xf32>
    %112 = arith.addf %109, %111 : vector<4x256xf32>
    %c0_63 = arith.constant 0 : index
    %c3_64 = arith.constant 3 : index
    %c0_65 = arith.constant 0 : index
    %c0_66 = arith.constant 0 : index
    %113 = vector.load %arg6[%c0_63, %c3_64, %c0_65, %c0_66] : memref<1x4x4x256xf32, #tpu.memory_space<vmem>>, vector<1x1x4x256xf32>
    %114 = vector.shape_cast %113 : vector<1x1x4x256xf32> to vector<4x256xf32>
    %115 = vector.shape_cast %112 : vector<4x256xf32> to vector<1x1x4x256xf32>
    tpu.vector_store %arg6[%c0_63, %c3_64, %c0_65, %c0_66], %115 {strides = array<i32>} : memref<1x4x4x256xf32, #tpu.memory_space<vmem>>, vector<1x1x4x256xf32>,
    return
  }
  func.func @transform_0(%arg0: i32) -> (i32, i32, i32) {
    %c0_i32 = arith.constant 0 : i32
    %c0_i32_0 = arith.constant 0 : i32
    %c0_i32_1 = arith.constant 0 : i32
    return %arg0, %c0_i32, %c0_i32_0 : i32, i32, i32
  }
  func.func @transform_1(%arg0: i32) -> (i32, i32, i32, i32) {
    %c0_i32 = arith.constant 0 : i32
    %c0_i32_0 = arith.constant 0 : i32
    %c0_i32_1 = arith.constant 0 : i32
    %c0_i32_2 = arith.constant 0 : i32
    return %arg0, %c0_i32, %c0_i32_0, %c0_i32_1 : i32, i32, i32, i32
  }
  func.func @transform_2(%arg0: i32) -> (i32, i32, i32, i32) {
    %c0_i32 = arith.constant 0 : i32
    %c0_i32_0 = arith.constant 0 : i32
    %c0_i32_1 = arith.constant 0 : i32
    %c0_i32_2 = arith.constant 0 : i32
    return %arg0, %c0_i32, %c0_i32_0, %c0_i32_1 : i32, i32, i32, i32
  }
  func.func @transform_3(%arg0: i32) -> (i32, i32) {
    %c0_i32 = arith.constant 0 : i32
    %c0_i32_0 = arith.constant 0 : i32
    %c0_i32_1 = arith.constant 0 : i32
    return %c0_i32, %c0_i32_0 : i32, i32
  }
  func.func @transform_4(%arg0: i32) -> (i32, i32) {
    %c0_i32 = arith.constant 0 : i32
    %c0_i32_0 = arith.constant 0 : i32
    %c0_i32_1 = arith.constant 0 : i32
    return %c0_i32, %c0_i32_0 : i32, i32
  }
  func.func @transform_5(%arg0: i32) -> (i32, i32, i32, i32) {
    %c0_i32 = arith.constant 0 : i32
    %c0_i32_0 = arith.constant 0 : i32
    %c0_i32_1 = arith.constant 0 : i32
    %c0_i32_2 = arith.constant 0 : i32
    return %arg0, %c0_i32, %c0_i32_0, %c0_i32_1 : i32, i32, i32, i32
  }
}

</mosaic_0001>

<llo_original>
// kernel: upskip.1
$region0: #{upskip.1}
  #allocation0 [shape = 'u32[]', space=smem, size = 0x4, offset = 0x4, fixed_abs, tag = 'smem constant byte address 0x4 - core index']
  #allocation1 [shape = 'u32[144,128]{1,0:T(1,128)}', space=vmem, size = 0x12000, scoped, tag = 'internal scratch']
  %s0 = inlined_call_operand.vmem [shape: bf16[2,8,256], index: 0, kind: input, shape index: {}]
  %s1 = inlined_call_operand.vmem [shape: f32[2,4,4,256], index: 1, kind: input, shape index: {}]
  %s2 = inlined_call_operand.vmem [shape: f32[2,4,4,256], index: 2, kind: input, shape index: {}]
  %s3 = inlined_call_operand.vmem [shape: bf16[4,8], index: 3, kind: input, shape index: {}]
  %s4 = inlined_call_operand.vmem [shape: f32[4,1], index: 4, kind: input, shape index: {}]
  %s5 = inlined_call_operand.vmem [shape: f32[2,4,4,256], index: 5, kind: output, shape index: {}]
  %s6 = sld [smem:[#allocation0]]
  $region53: #{upskip.1} parent=0
    _
  %s8 = ssub.s32 1, %s6
  %s9 = scalar_select 0, %s8, %s6
  loop: start=0, step=1, limit=4
  $region2: #{upskip.1} parent=0 // loop_pre_header
    _
  $region3: #{upskip.1} parent=0 // loop_header
    %s11 = sphi 0, %s15
    %p12 = scmp.ge.s32.totalorder %s11, 4
    %s21 = sphi 0, %s23
    %s24 = sphi 0, %s21
    %s25 = sphi 0, %s24
    %s41 = sphi 0, %s25
    %s47 = sphi 0, %s49
    %s50 = sphi 0, %s47
    %s51 = sphi 0, %s50
    %s67 = sphi 0, %s51
    %s73 = sphi 0, %s75
    %s76 = sphi 0, %s73
    %s77 = sphi 0, %s76
    %s93 = sphi 0, %s77
    %s97 = sphi 0, %s97
    %s99 = sphi 0, %s97
    %s100 = sphi 0, %s99
    %s114 = sphi 0, %s100
    %s118 = sphi 0, %s118
    %s120 = sphi 0, %s118
    %s121 = sphi 0, %s120
    %s135 = sphi 0, %s121
    %s141 = sphi 0, %s143
    %s144 = sphi 0, %s141
    %s145 = sphi 0, %s144
    %s161 = sphi 0, %s145
  $region4: #{upskip.1} parent=0 // loop_header_branch
    %14 = sbr.rel (%p12) target = $region8
  $region5: #{upskip.1} parent=0 // loop_body
    %s16 = ssub.s32 %s11, 1
    %s17 = ssub.s32 %s11, 2
    %s18 = sadd.s32 %s11, 1
    %s19 = ssub.s32 %s11, %s18
    %p20 = scmp.eq.s32.totalorder %s19, 0
    %s22 = sadd.s32 %s21, 1
    %s23 = scalar_select %p20, %s21, %s22
    %p26 = pneg %p20
    %p27 = scmp.eq.s32.totalorder %s11, 1
    %p28 = por %p26, %p27
    %p29 = scmp.ne.s32.totalorder %s21, %s24
    %p30 = scmp.eq.s32.totalorder %s11, 0
    %p31 = por %p29, %p30
    %p32 = scmp.ne.s32.totalorder %s21, %s24
    %p33 = scmp.eq.s32.totalorder %s16, 1
    %p34 = por %p32, %p33
    %p35 = scmp.ne.s32.totalorder %s24, %s25
    %p36 = scmp.eq.s32.totalorder %s16, 0
    %p37 = por %p35, %p36
    %p38 = scmp.ne.s32.totalorder %s24, %s25
    %p39 = scmp.eq.s32.totalorder %s17, 1
    %p40 = por %p38, %p39
    %p42 = scmp.ne.s32.totalorder %s25, %s41
    %p43 = scmp.eq.s32.totalorder %s17, 0
    %p44 = por %p42, %p43
    %s45 = ssub.s32 %s11, %s18
    %p46 = scmp.eq.s32.totalorder %s45, 0
    %s48 = sadd.s32 %s47, 1
    %s49 = scalar_select %p46, %s47, %s48
    %p52 = pneg %p46
    %p53 = scmp.eq.s32.totalorder %s11, 1
    %p54 = por %p52, %p53
    %p55 = scmp.ne.s32.totalorder %s47, %s50
    %p56 = scmp.eq.s32.totalorder %s11, 0
    %p57 = por %p55, %p56
    %p58 = scmp.ne.s32.totalorder %s47, %s50
    %p59 = scmp.eq.s32.totalorder %s16, 1
    %p60 = por %p58, %p59
    %p61 = scmp.ne.s32.totalorder %s50, %s51
    %p62 = scmp.eq.s32.totalorder %s16, 0
    %p63 = por %p61, %p62
    %p64 = scmp.ne.s32.totalorder %s50, %s51
    %p65 = scmp.eq.s32.totalorder %s17, 1
    %p66 = por %p64, %p65
    %p68 = scmp.ne.s32.totalorder %s51, %s67
    %p69 = scmp.eq.s32.totalorder %s17, 0
    %p70 = por %p68, %p69
    %s71 = ssub.s32 %s11, %s18
    %p72 = scmp.eq.s32.totalorder %s71, 0
    %s74 = sadd.s32 %s73, 1
    %s75 = scalar_select %p72, %s73, %s74
    %p78 = pneg %p72
    %p79 = scmp.eq.s32.totalorder %s11, 1
    %p80 = por %p78, %p79
    %p81 = scmp.ne.s32.totalorder %s73, %s76
    %p82 = scmp.eq.s32.totalorder %s11, 0
    %p83 = por %p81, %p82
    %p84 = scmp.ne.s32.totalorder %s73, %s76
    %p85 = scmp.eq.s32.totalorder %s16, 1
    %p86 = por %p84, %p85
    %p87 = scmp.ne.s32.totalorder %s76, %s77
    %p88 = scmp.eq.s32.totalorder %s16, 0
    %p89 = por %p87, %p88
    %p90 = scmp.ne.s32.totalorder %s76, %s77
    %p91 = scmp.eq.s32.totalorder %s17, 1
    %p92 = por %p90, %p91
    %p94 = scmp.ne.s32.totalorder %s77, %s93
    %p95 = scmp.eq.s32.totalorder %s17, 0
    %p96 = por %p94, %p95
    %s98 = sadd.s32 %s97, 1
    %p101 = scmp.eq.s32.totalorder %s11, 1
    %p102 = scmp.ne.s32.totalorder %s97, %s99
    %p103 = scmp.eq.s32.totalorder %s11, 0
    %p104 = por %p102, %p103
    %p105 = scmp.ne.s32.totalorder %s97, %s99
    %p106 = scmp.eq.s32.totalorder %s16, 1
    %p107 = por %p105, %p106
    %p108 = scmp.ne.s32.totalorder %s99, %s100
    %p109 = scmp.eq.s32.totalorder %s16, 0
    %p110 = por %p108, %p109
    %p111 = scmp.ne.s32.totalorder %s99, %s100
    %p112 = scmp.eq.s32.totalorder %s17, 1
    %p113 = por %p111, %p112
    %p115 = scmp.ne.s32.totalorder %s100, %s114
    %p116 = scmp.eq.s32.totalorder %s17, 0
    %p117 = por %p115, %p116
    %s119 = sadd.s32 %s118, 1
    %p122 = scmp.eq.s32.totalorder %s11, 1
    %p123 = scmp.ne.s32.totalorder %s118, %s120
    %p124 = scmp.eq.s32.totalorder %s11, 0
    %p125 = por %p123, %p124
    %p126 = scmp.ne.s32.totalorder %s118, %s120
    %p127 = scmp.eq.s32.totalorder %s16, 1
    %p128 = por %p126, %p127
    %p129 = scmp.ne.s32.totalorder %s120, %s121
    %p130 = scmp.eq.s32.totalorder %s16, 0
    %p131 = por %p129, %p130
    %p132 = scmp.ne.s32.totalorder %s120, %s121
    %p133 = scmp.eq.s32.totalorder %s17, 1
    %p134 = por %p132, %p133
    %p136 = scmp.ne.s32.totalorder %s121, %s135
    %p137 = scmp.eq.s32.totalorder %s17, 0
    %p138 = por %p136, %p137
    %s139 = ssub.s32 %s11, %s18
    %p140 = scmp.eq.s32.totalorder %s139, 0
    %s142 = sadd.s32 %s141, 1
    %s143 = scalar_select %p140, %s141, %s142
    %p146 = pneg %p140
    %p147 = scmp.eq.s32.totalorder %s11, 1
    %p148 = por %p146, %p147
    %p149 = scmp.ne.s32.totalorder %s141, %s144
    %p150 = scmp.eq.s32.totalorder %s11, 0
    %p151 = por %p149, %p150
    %p152 = scmp.ne.s32.totalorder %s141, %s144
    %p153 = scmp.eq.s32.totalorder %s16, 1
    %p154 = por %p152, %p153
    %p155 = scmp.ne.s32.totalorder %s144, %s145
    %p156 = scmp.eq.s32.totalorder %s16, 0
    %p157 = por %p155, %p156
    %p158 = scmp.ne.s32.totalorder %s144, %s145
    %p159 = scmp.eq.s32.totalorder %s17, 1
    %p160 = por %p158, %p159
    %p162 = scmp.ne.s32.totalorder %s145, %s161
    %p163 = scmp.eq.s32.totalorder %s17, 0
    %p164 = por %p162, %p163
    %p165 = scmp.le.s32.totalorder 1, %s11
    %p166 = scmp.lt.s32.totalorder %s11, 3
    %p167 = pnand %p165, %p166
    %p168 = pneg %p167
    // Predicated region
    $region9: #{upskip.1} parent=5 // pred_check
      _
    $region10: #{upskip.1} parent=5 // pred_check_branch
      %170 = sbr.rel (%p167) target = $region12
    $region11: #{upskip.1} parent=5 // pred_region
      %s171 = ssub.s32 %s11, 1
      // Predicated region
      $region13: #{upskip.1} parent=11 // pred_check
        %p172 = pneg %p110
      $region14: #{upskip.1} parent=11 // pred_check_branch
        %174 = sbr.rel (%p172) target = $region16
      $region15: #{upskip.1} parent=11 // pred_region
        _
      $region16: #{upskip.1} parent=11 // pred_fallthru
        _
      // Predicated region
      $region17: #{upskip.1} parent=11 // pred_check
        %p175 = pneg %p131
      $region18: #{upskip.1} parent=11 // pred_check_branch
        %177 = sbr.rel (%p175) target = $region20
      $region19: #{upskip.1} parent=11 // pred_region
        _
      $region20: #{upskip.1} parent=11 // pred_fallthru
        _
    $region12: #{upskip.1} parent=5 // pred_fallthru
      _
    %p178 = scmp.lt.s32.totalorder %s11, 2
    // Predicated region
    $region21: #{upskip.1} parent=5 // pred_check
      %p179 = pneg %p178
    $region22: #{upskip.1} parent=5 // pred_check_branch
      %181 = sbr.rel (%p179) target = $region24
    $region23: #{upskip.1} parent=5 // pred_region
      // Predicated region
      $region25: #{upskip.1} parent=23 // pred_check
        %p182 = pneg %p31
      $region26: #{upskip.1} parent=23 // pred_check_branch
        %184 = sbr.rel (%p182) target = $region28
      $region27: #{upskip.1} parent=23 // pred_region
        %p185 = scmp.lt.s32.totalorder %s11, 1
        %s186 = scalar_select %p185, %s11, 1
        %s187 = smul.addr %s186, 2
        %s188 = smul.addr %s187, 4
        %s189 = scalar_lea.vmem %s0, %s188
      $region28: #{upskip.1} parent=23 // pred_fallthru
        _
      // Predicated region
      $region29: #{upskip.1} parent=23 // pred_check
        %p190 = pneg %p57
      $region30: #{upskip.1} parent=23 // pred_check_branch
        %192 = sbr.rel (%p190) target = $region32
      $region31: #{upskip.1} parent=23 // pred_region
        %p193 = scmp.lt.s32.totalorder %s11, 1
        %s194 = scalar_select %p193, %s11, 1
        %s195 = smul.addr %s194, 8
        %s196 = smul.addr %s195, 4
        %s197 = scalar_lea.vmem %s1, %s196
      $region32: #{upskip.1} parent=23 // pred_fallthru
        _
      // Predicated region
      $region33: #{upskip.1} parent=23 // pred_check
        %p198 = pneg %p83
      $region34: #{upskip.1} parent=23 // pred_check_branch
        %200 = sbr.rel (%p198) target = $region36
      $region35: #{upskip.1} parent=23 // pred_region
        %p201 = scmp.lt.s32.totalorder %s11, 1
        %s202 = scalar_select %p201, %s11, 1
        %s203 = smul.addr %s202, 8
        %s204 = smul.addr %s203, 4
        %s205 = scalar_lea.vmem %s2, %s204
      $region36: #{upskip.1} parent=23 // pred_fallthru
        _
    $region24: #{upskip.1} parent=5 // pred_fallthru
      _
    %p206 = scmp.le.s32.totalorder 1, %s11
    %p207 = scmp.lt.s32.totalorder %s11, 3
    %p208 = pnand %p206, %p207
    %p209 = pneg %p208
    // Predicated region
    $region37: #{upskip.1} parent=5 // pred_check
      _
    $region38: #{upskip.1} parent=5 // pred_check_branch
      %211 = sbr.rel (%p208) target = $region40
    $region39: #{upskip.1} parent=5 // pred_region
      %s212 = ssub.s32 %s11, 1
      %p213 = scmp.lt.s32.totalorder %s16, 1
      %s214 = scalar_select %p213, %s16, 1
      %s215 = smul.addr %s214, 2
      %s216 = smul.addr %s215, 4
      %s217 = scalar_lea.vmem %s0, %s216
      %p218 = pneg %p37
      %p219 = pneg %p34
      %p220 = scmp.lt.s32.totalorder %s16, 1
      %s221 = scalar_select %p220, %s16, 1
      %s222 = smul.addr %s221, 8
      %s223 = smul.addr %s222, 4
      %s224 = scalar_lea.vmem %s1, %s223
      %p225 = pneg %p63
      %p226 = pneg %p60
      %p227 = scmp.lt.s32.totalorder %s16, 1
      %s228 = scalar_select %p227, %s16, 1
      %s229 = smul.addr %s228, 8
      %s230 = smul.addr %s229, 4
      %s231 = scalar_lea.vmem %s2, %s230
      %p232 = pneg %p89
      %p233 = pneg %p86
      %p234 = pneg %p110
      %p235 = pneg %p107
      %p236 = pneg %p131
      %p237 = pneg %p128
      %p238 = pneg %p157
      %p239 = pneg %p154
      %p240 = scmp.lt.s32.totalorder %s16, 1
      %s241 = scalar_select %p240, %s16, 1
      %s242 = smul.addr %s241, 8
      %s243 = smul.addr %s242, 4
      %s244 = scalar_lea.vmem %s5, %s243
      %p245 = scmp.lt.s32.totalorder %s16, 1
      %s246 = scalar_select %p245, %s16, 1
      %s247 = smul.addr %s246, 2
      %s248 = smul.addr %s247, 4
      %s249 = scalar_lea.vmem %s0, %s248
      %p250 = scmp.lt.s32.totalorder %s16, 1
      %s251 = scalar_select %p250, %s16, 1
      %s252 = smul.addr %s251, 8
      %s253 = smul.addr %s252, 4
      %s254 = scalar_lea.vmem %s1, %s253
      %p255 = scmp.lt.s32.totalorder %s16, 1
      %s256 = scalar_select %p255, %s16, 1
      %s257 = smul.addr %s256, 8
      %s258 = smul.addr %s257, 4
      %s259 = scalar_lea.vmem %s2, %s258
      %p260 = scmp.lt.s32.totalorder %s16, 1
      %s261 = scalar_select %p260, %s16, 1
      %s262 = smul.addr %s261, 8
      %s263 = smul.addr %s262, 4
      %s264 = scalar_lea.vmem %s5, %s263
      %v266 = vld [vmem:[%s249] sm:$0xff]
      %v267 = vld [vmem:[%s3] sm:$0x3]
      %v268 = vld [vmem:[%s4] sm:$0xf]
      %270 = vset.pattern.permute.xlu0 0
      %271 = vperm.xlu0 %270, %v268
      %v272 = vpop.permute.xlu0 %271
      %v275 = vunpack.c.l.b16 %v266
      %v276 = vunpack.c.h.b16 %v266
      %v277 = vpack.c.b16 %v275, %v275
      %v278 = vpack.c.b16 %v276, %v276
      %vm279 = vcmask 64512
      %v281 = vsel %vm279, %v267, 0
      %vm283 = vcmask 1043456
      %v285 = vsel %vm283, %v277, 0
      %v288 = vsel %vm283, %v278, 0
      %290 = vmatprep.subr.bf16.mxu0 %v288
      %291 = vmatpush1.bf16.msra.mxu0 %v285
      %292 = vmatprep.subr.bf16.mxu0 0
      %293 = vmatpush1.bf16.msra.mxu0 0
      %294 = vmatprep.subr.bf16.mxu0 0
      %295 = vmatpush1.bf16.msra.mxu0 0
      %296 = vmatprep.subr.bf16.mxu0 0
      %297 = vmatpush1.bf16.msra.mxu0 0
      %298 = vmatprep.subr.bf16.mxu0 0
      %299 = vmatpush1.bf16.msra.mxu0 0
      %300 = vmatprep.subr.bf16.mxu0 0
      %301 = vmatpush1.bf16.msra.mxu0 0
      %302 = vmatprep.subr.bf16.mxu0 0
      %303 = vmatpush1.bf16.msra.mxu0 0
      %304 = vmatprep.subr.bf16.mxu0 0
      %305 = vmatpush1.bf16.msra.mxu0 0
      %306 = vmatprep.subr.bf16.mxu0 0
      %307 = vmatpush1.bf16.msra.mxu0 0
      %308 = vmatprep.subr.bf16.mxu0 0
      %309 = vmatpush1.bf16.msra.mxu0 0
      %310 = vmatprep.subr.bf16.mxu0 0
      %311 = vmatpush1.bf16.msra.mxu0 0
      %312 = vmatprep.subr.bf16.mxu0 0
      %313 = vmatpush1.bf16.msra.mxu0 0
      %314 = vmatprep.subr.bf16.mxu0 0
      %315 = vmatpush1.bf16.msra.mxu0 0
      %316 = vmatprep.subr.bf16.mxu0 0
      %317 = vmatpush1.bf16.msra.mxu0 0
      %318 = vmatprep.subr.bf16.mxu0 0
      %319 = vmatpush1.bf16.msra.mxu0 0
      %320 = vmatprep.subr.bf16.mxu0 0
      %321 = vmatpush1.bf16.msra.mxu0 0
      %322 = vmatprep.mubr.bf16.mxu0 0
      %323 = vmatmul.mubr.bf16.gmra.mrb[0].mxu0 %v281
      %v324 = vpop.f32.mrb[0].mxu0
      %v325 = vadd.f32 %v272, %v324
      %v326 = vpop.f32.mrb[0].mxu0
      %v327 = vadd.f32 %v272, %v326
      %v328 = vpop.f32.mrb[0].mxu0
      %v329 = vpop.f32.mrb[0].mxu0
      %330 = vdwg.mxu0
      %333 = vrot.lane.b32.xlu0 %v325, 16
      %v334 = vpop.permute.xlu0 %333
      %335 = vrot.lane.b32.xlu0 %v327, 16
      %v336 = vpop.permute.xlu0 %335
      %vm337 = vcmask 130048
      %v338 = vsel %vm337, %v334, %v336
      %v341 = vsel %vm337, %v325, %v334
      %342 = vrot.lane.b32.xlu0 %v325, 112
      %v343 = vpop.permute.xlu0 %342
      %344 = vrot.lane.b32.xlu0 %v327, 112
      %v345 = vpop.permute.xlu0 %344
      %vm346 = vcmask 916480
      %v347 = vsel %vm346, %v343, %v345
      %v350 = vsel %vm346, %v345, %v327
      %v351 = vmul.f32 %v325, 0.75
      %v352 = vmul.f32 %v327, 0.75
      %v353 = vmul.f32 %v341, 0.25
      %v354 = vmul.f32 %v338, 0.25
      %v355 = vadd.f32 %v351, %v353
      %v356 = vadd.f32 %v352, %v354
      %v357 = vmul.f32 %v347, 0.25
      %v358 = vmul.f32 %v350, 0.25
      %v359 = vadd.f32 %v351, %v357
      %v360 = vadd.f32 %v352, %v358
      %v361 = vlaneseq
      %v362 = vand.u32 %v361, 127
      %v363 = vadd.s32 %v362, 128
      %vm364 = vcmp.lt.s32.totalorder %v362, 0
      %v365 = vsub.s32 0, %v362
      %v366 = vsel %vm364, %v365, %v362
      %v367 = vshrl.u32 %v366, 4
      %v368 = vand.u32 %v366, 15
      %v369 = vsub.s32 0, %v368
      %v370 = vsel %vm364, %v369, %v368
      %vm371 = vcmp.lt.s32.totalorder %v363, 0
      %v372 = vsub.s32 0, %v363
      %v373 = vsel %vm371, %v372, %v363
      %v374 = vshrl.u32 %v373, 4
      %v375 = vand.u32 %v373, 15
      %v376 = vsub.s32 0, %v375
      %v377 = vsel %vm371, %v376, %v375
      %vm378 = vcmp.ne.s32.totalorder %v370, 0
      %vm379 = vcmp.ne.s32.totalorder %v377, 0
      %vm380 = vcmp.lt.s32.totalorder %v370, 0
      %vm381 = vcmp.lt.s32.totalorder %v377, 0
      %vm382 = vmand %vm380, %vm378
      %vm383 = vmand %vm381, %vm379
      %v384 = vadd.s32 %v370, 16
      %v385 = vadd.s32 %v377, 16
      %v386 = vsel %vm382, %v384, %v370
      %v387 = vsel %vm383, %v385, %v377
      %vm388 = vcmp.eq.s32.totalorder %v386, 0
      %vm389 = vcmp.eq.s32.totalorder %v387, 0
      %vm390 = vcmp.eq.s32.totalorder %v386, 15
      %vm391 = vcmp.eq.s32.totalorder %v387, 15
      %v392 = vmul.f32 %v355, 0.75
      %v393 = vmul.f32 %v356, 0.75
      %396 = vrot.lane.b32.xlu0 %v355, 1
      %v397 = vpop.permute.xlu0 %396
      %398 = vrot.lane.b32.xlu0 %v356, 1
      %v399 = vpop.permute.xlu0 %398
      %vm400 = vcmask 7168
      %v401 = vsel %vm400, %v397, %v399
      %v404 = vsel %vm400, %v355, %v397
      %v405 = vsel %vm388, %v355, %v404
      %v406 = vsel %vm389, %v356, %v401
      %v407 = vmul.f32 %v405, 0.25
      %v408 = vmul.f32 %v406, 0.25
      %v409 = vadd.f32 %v392, %v407
      %v410 = vadd.f32 %v393, %v408
      %411 = vrot.lane.b32.xlu0 %v355, 127
      %v412 = vpop.permute.xlu0 %411
      %413 = vrot.lane.b32.xlu0 %v356, 127
      %v414 = vpop.permute.xlu0 %413
      %vm415 = vcmask 1039360
      %v416 = vsel %vm415, %v412, %v414
      %v419 = vsel %vm415, %v414, %v356
      %v420 = vsel %vm390, %v355, %v416
      %v421 = vsel %vm391, %v356, %v419
      %v422 = vmul.f32 %v420, 0.25
      %v423 = vmul.f32 %v421, 0.25
      %v424 = vadd.f32 %v392, %v422
      %v425 = vadd.f32 %v393, %v423
      %v426 = vmul.f32 %v359, 0.75
      %v427 = vmul.f32 %v360, 0.75
      %430 = vrot.lane.b32.xlu0 %v359, 1
      %v431 = vpop.permute.xlu0 %430
      %432 = vrot.lane.b32.xlu0 %v360, 1
      %v433 = vpop.permute.xlu0 %432
      %v434 = vsel %vm400, %v431, %v433
      %v437 = vsel %vm400, %v359, %v431
      %v438 = vsel %vm388, %v359, %v437
      %v439 = vsel %vm389, %v360, %v434
      %v440 = vmul.f32 %v438, 0.25
      %v441 = vmul.f32 %v439, 0.25
      %v442 = vadd.f32 %v426, %v440
      %v443 = vadd.f32 %v427, %v441
      %444 = vrot.lane.b32.xlu0 %v359, 127
      %v445 = vpop.permute.xlu0 %444
      %446 = vrot.lane.b32.xlu0 %v360, 127
      %v447 = vpop.permute.xlu0 %446
      %v448 = vsel %vm415, %v445, %v447
      %v451 = vsel %vm415, %v447, %v360
      %v452 = vsel %vm390, %v359, %v448
      %v453 = vsel %vm391, %v360, %v451
      %v454 = vmul.f32 %v452, 0.25
      %v455 = vmul.f32 %v453, 0.25
      %v456 = vadd.f32 %v426, %v454
      %v457 = vadd.f32 %v427, %v455
      %v458 = vld [vmem:[%s254] sm:$0xff]
      %v460 = vcombine.high %v458, %v458
      %v462 = vadd.f32 %v409, %v458
      %v463 = vadd.f32 %v410, %v460
      %v464 = vld [vmem:[%s259] sm:$0xff]
      %v466 = vcombine.high %v464, %v464
      %v468 = vadd.f32 %v462, %v464
      %v469 = vadd.f32 %v463, %v466
      %v472 = vcombine.low %v468, %v469
      %474 = vst [vmem:[%s264] sm:$0xff] %v472
      %s475 = scalar_lea.vmem %s254, 8
      %v476 = vld [vmem:[%s475] sm:$0xff]
      %v478 = vcombine.high %v476, %v476
      %v480 = vadd.f32 %v424, %v476
      %v481 = vadd.f32 %v425, %v478
      %s482 = scalar_lea.vmem %s259, 8
      %v483 = vld [vmem:[%s482] sm:$0xff]
      %v485 = vcombine.high %v483, %v483
      %v487 = vadd.f32 %v480, %v483
      %v488 = vadd.f32 %v481, %v485
      %v491 = vcombine.low %v487, %v488
      %s493 = scalar_lea.vmem %s264, 8
      %494 = vst [vmem:[%s493] sm:$0xff] %v491
      %s495 = scalar_lea.vmem %s254, 16
      %v496 = vld [vmem:[%s495] sm:$0xff]
      %v498 = vcombine.high %v496, %v496
      %v500 = vadd.f32 %v442, %v496
      %v501 = vadd.f32 %v443, %v498
      %s502 = scalar_lea.vmem %s259, 16
      %v503 = vld [vmem:[%s502] sm:$0xff]
      %v505 = vcombine.high %v503, %v503
      %v507 = vadd.f32 %v500, %v503
      %v508 = vadd.f32 %v501, %v505
      %v511 = vcombine.low %v507, %v508
      %s513 = scalar_lea.vmem %s264, 16
      %514 = vst [vmem:[%s513] sm:$0xff] %v511
      %s515 = scalar_lea.vmem %s254, 24
      %v516 = vld [vmem:[%s515] sm:$0xff]
      %v518 = vcombine.high %v516, %v516
      %v520 = vadd.f32 %v456, %v516
      %v521 = vadd.f32 %v457, %v518
      %s522 = scalar_lea.vmem %s259, 24
      %v523 = vld [vmem:[%s522] sm:$0xff]
      %v525 = vcombine.high %v523, %v523
      %v527 = vadd.f32 %v520, %v523
      %v528 = vadd.f32 %v521, %v525
      %v531 = vcombine.low %v527, %v528
      %s533 = scalar_lea.vmem %s264, 24
      %534 = vst [vmem:[%s533] sm:$0xff] %v531
      %p535 = scmp.lt.s32.totalorder %s16, 1
      %s536 = scalar_select %p535, %s16, 1
      %s537 = smul.addr %s536, 8
      %s538 = smul.addr %s537, 4
      %s539 = scalar_lea.vmem %s5, %s538
      // Predicated region
      $region41: #{upskip.1} parent=39 // pred_check
        %p540 = pneg %p154
      $region42: #{upskip.1} parent=39 // pred_check_branch
        %542 = sbr.rel (%p540) target = $region44
      $region43: #{upskip.1} parent=39 // pred_region
        _
      $region44: #{upskip.1} parent=39 // pred_fallthru
        _
    $region40: #{upskip.1} parent=5 // pred_fallthru
      _
    %p543 = scmp.le.s32.totalorder 2, %s11
    // Predicated region
    $region45: #{upskip.1} parent=5 // pred_check
      %p544 = pneg %p543
    $region46: #{upskip.1} parent=5 // pred_check_branch
      %546 = sbr.rel (%p544) target = $region48
    $region47: #{upskip.1} parent=5 // pred_region
      %s547 = ssub.s32 %s11, 2
      // Predicated region
      $region49: #{upskip.1} parent=47 // pred_check
        %p548 = pneg %p160
      $region50: #{upskip.1} parent=47 // pred_check_branch
        %550 = sbr.rel (%p548) target = $region52
      $region51: #{upskip.1} parent=47 // pred_region
        %p551 = scmp.lt.s32.totalorder %s17, 1
        %s552 = scalar_select %p551, %s17, 1
        %s553 = smul.addr %s552, 8
        %s554 = smul.addr %s553, 4
        %s555 = scalar_lea.vmem %s5, %s554
      $region52: #{upskip.1} parent=47 // pred_fallthru
        _
    $region48: #{upskip.1} parent=5 // pred_fallthru
      _
  $region6: #{upskip.1} parent=0 // loop_footer
    %s15 = sadd.s32 1, %s11
  $region7: #{upskip.1} parent=0 // loop_footer_branch
    %10 = sbr.rel target = $region3
  $region8: #{upskip.1} parent=0 // loop_exit
    _

</llo_original>
